<compile_context>
chip_gen: v7x
topology: tpu7x:2x2x1
jax: 0.10.0
libtpu: 0.0.40
codegen_flags: <defaults>
</compile_context>

<pallas_src>
import functools
import math

import jax
import jax.numpy as jnp
from jax.experimental import pallas as pl
from jax.experimental.pallas import tpu as pltpu


def _layernorm_kernel(x_ref, scale_ref, shift_ref, o_ref, *, eps, inv_d, k, d):
    x = x_ref[...].astype(jnp.float32)                 # (TM, K*D) lane-dense load
    tm = x.shape[0]
    if k > 1:
        x = x.reshape(tm, k, d)                        # per-logical-row view
    # Centered two-pass statistics (x already in registers -> no extra HBM traffic,
    # avoids E[x^2]-E[x]^2 cancellation).
    mean = jnp.sum(x, axis=-1, keepdims=True) * inv_d
    xc = x - mean
    var = jnp.sum(xc * xc, axis=-1, keepdims=True) * inv_d
    norm = xc * jax.lax.rsqrt(var + eps)               # rsqrt on EUP (free slot)
    if k > 1:
        norm = norm.reshape(tm, k * d)                 # back to lane-dense slab
    y = (norm * scale_ref[...].astype(jnp.float32)
         + shift_ref[...].astype(jnp.float32))
    o_ref[...] = y.astype(o_ref.dtype)


def _layernorm_ref(x, scale, shift, eps):
    mean = x.mean(axis=-1, keepdims=True)
    var = ((x - mean) ** 2).mean(axis=-1, keepdims=True)
    return scale * (x - mean) / jnp.sqrt(var + eps) + shift


def layernorm(x, scale, shift, *, eps=1e-5):
    """x: (..., emb_dim); scale, shift: (emb_dim,)."""
    orig_shape = x.shape
    d = orig_shape[-1]
    rows = 1
    for s in orig_shape[:-1]:
        rows *= s

    # ---- Lane-dense packing of the feature dim --------------------------
    # (rows, d) is contiguous in HBM, so k consecutive logical rows can be
    # viewed as one physical row of width k*d (a multiple of 128).
    if d % 128 == 0:
        k = 1
    else:
        k = 128 // math.gcd(d, 128)
        if rows % k != 0 or k * d > 2048:
            k = 1  # unpackable: still correct, block equals full (masked) width

    rows_p = rows // k
    w = k * d

    x2 = x.reshape(rows_p, w)
    if k > 1:
        scale_w = jnp.tile(scale.reshape(1, d), (1, k))
        shift_w = jnp.tile(shift.reshape(1, d), (1, k))
    else:
        scale_w = scale.reshape(1, d)
        shift_w = shift.reshape(1, d)

    # ---- VMEM-aware row-tile selection ----------------------------------
    itemsize = jnp.dtype(x.dtype).itemsize
    sublane = max(8, 32 // itemsize)          # 8 (f32) / 16 (bf16) / 32 (int8/fp8)
    vmem_limit = 48 * 1024 * 1024             # safe scoped cap on v5e/v6e/v7x
    tile_budget = 32 * 1024 * 1024            # double-buffered in+out + f32 temps
    per_row_bytes = w * (4 * itemsize + 16)   # 2x(in+out) tiles + f32 working copies
    max_rows_fit = tile_budget // per_row_bytes
    tm_cap = 512                              # roofline knee; fits v7x's 64 MiB VMEM

    if max_rows_fit < min(sublane, rows_p):
        # TODO(synk): very wide d needs a d-chunked two-phase pipeline
        # (accumulate s1/s2 over feature chunks, then a normalize pass).
        return _layernorm_ref(x, scale, shift, eps)

    if rows_p <= min(tm_cap, max_rows_fit):
        tm = rows_p                           # single step; block equals full dim
    else:
        tm = min(tm_cap, (max_rows_fit // sublane) * sublane)

    grid = (pl.cdiv(rows_p, tm),)             # ragged tail handled by Pallas masking

    kernel = functools.partial(_layernorm_kernel, eps=eps, inv_d=1.0 / d, k=k, d=d)

    out = pl.pallas_call(
        kernel,
        out_shape=jax.ShapeDtypeStruct((rows_p, w), x.dtype),
        grid_spec=pltpu.PrefetchScalarGridSpec(
            num_scalar_prefetch=0,
            grid=grid,
            in_specs=[
                pl.BlockSpec((tm, w), lambda i: (i, 0)),
                pl.BlockSpec((1, w), lambda i: (0, 0)),   # scale: resident, no re-DMA
                pl.BlockSpec((1, w), lambda i: (0, 0)),   # shift: resident, no re-DMA
            ],
            out_specs=pl.BlockSpec((tm, w), lambda i: (i, 0)),
        ),
        compiler_params=pltpu.CompilerParams(
            dimension_semantics=("parallel",),
            vmem_limit_bytes=vmem_limit,
        ),
    )(x2, scale_w, shift_w)

    return out.reshape(orig_shape)


if __name__ == "__main__":
    key = jax.random.PRNGKey(0)
    batch, seq, emb_dim = 2, 8, 32
    x = jax.random.normal(key, (batch, seq, emb_dim), dtype=jnp.float32)

    # Deterministic parameter init matching nn.Parameter(torch.ones/zeros(emb_dim))
    scale = jnp.ones((emb_dim,), dtype=jnp.float32)
    shift = jnp.zeros((emb_dim,), dtype=jnp.float32)

    y = layernorm(x, scale, shift)
    jax.block_until_ready(y)

    ref = _layernorm_ref(x, scale, shift, 1e-5)
    assert jnp.allclose(y, ref, atol=1e-5, rtol=1e-5), "mismatch vs reference"

    print("KERNEL_OK")
</pallas_src>

<mosaic_0001>
module attributes {stable_mosaic.version = 11 : i64} {
  func.func @_layernorm_kernel(%arg0: i32, %arg1: memref<4x128xf32, #tpu.memory_space<vmem>>, %arg2: memref<1x128xf32, #tpu.memory_space<vmem>>, %arg3: memref<1x128xf32, #tpu.memory_space<vmem>>, %arg4: memref<4x128xf32, #tpu.memory_space<vmem>>) attributes {dimension_semantics = [#tpu.dimension_semantics<parallel>], iteration_bounds = array<i64: 1>, scalar_prefetch = 0 : i64, scratch_operands = 0 : i64, tpu.core_type = #tpu.core_type<tc>, window_params = [{transform_indices = @transform_0, window_bounds = array<i64: 4, 128>}, {pipeline_mode = #tpu.pipeline_mode<synchronous>, transform_indices = @transform_1, window_bounds = array<i64: 1, 128>}, {pipeline_mode = #tpu.pipeline_mode<synchronous>, transform_indices = @transform_2, window_bounds = array<i64: 1, 128>}, {transform_indices = @transform_3, window_bounds = array<i64: 4, 128>}]} {
    %c0 = arith.constant 0 : index
    %c0_0 = arith.constant 0 : index
    %0 = vector.load %arg1[%c0, %c0_0] : memref<4x128xf32, #tpu.memory_space<vmem>>, vector<4x128xf32>
    %1 = vector.shape_cast %0 : vector<4x128xf32> to vector<4x4x32xf32>
    %cst = arith.constant dense<0.000000e+00> : vector<4x4xf32>
    %2 = vector.multi_reduction <add>, %1, %cst [2] : vector<4x4x32xf32> to vector<4x4xf32>
    %3 = vector.shape_cast %2 : vector<4x4xf32> to vector<4x4x1xf32>
    %cst_1 = arith.constant 3.125000e-02 : f32
    %4 = vector.broadcast %cst_1 : f32 to vector<4x4x1xf32>
    %5 = arith.mulf %3, %4 : vector<4x4x1xf32>
    %6 = vector.broadcast %5 : vector<4x4x1xf32> to vector<4x4x32xf32>
    %7 = arith.subf %1, %6 : vector<4x4x32xf32>
    %8 = arith.mulf %7, %7 : vector<4x4x32xf32>
    %cst_2 = arith.constant dense<0.000000e+00> : vector<4x4xf32>
    %9 = vector.multi_reduction <add>, %8, %cst_2 [2] : vector<4x4x32xf32> to vector<4x4xf32>
    %10 = vector.shape_cast %9 : vector<4x4xf32> to vector<4x4x1xf32>
    %cst_3 = arith.constant 3.125000e-02 : f32
    %11 = vector.broadcast %cst_3 : f32 to vector<4x4x1xf32>
    %12 = arith.mulf %10, %11 : vector<4x4x1xf32>
    %cst_4 = arith.constant 9.99999974E-6 : f32
    %13 = vector.broadcast %cst_4 : f32 to vector<4x4x1xf32>
    %14 = arith.addf %12, %13 : vector<4x4x1xf32>
    %15 = math.rsqrt %14 : vector<4x4x1xf32>
    %16 = vector.broadcast %15 : vector<4x4x1xf32> to vector<4x4x32xf32>
    %17 = arith.mulf %7, %16 : vector<4x4x32xf32>
    %18 = vector.shape_cast %17 : vector<4x4x32xf32> to vector<4x128xf32>
    %c0_5 = arith.constant 0 : index
    %c0_6 = arith.constant 0 : index
    %19 = vector.load %arg2[%c0_5, %c0_6] : memref<1x128xf32, #tpu.memory_space<vmem>>, vector<1x128xf32>
    %20 = vector.broadcast %19 : vector<1x128xf32> to vector<4x128xf32>
    %21 = arith.mulf %18, %20 : vector<4x128xf32>
    %c0_7 = arith.constant 0 : index
    %c0_8 = arith.constant 0 : index
    %22 = vector.load %arg3[%c0_7, %c0_8] : memref<1x128xf32, #tpu.memory_space<vmem>>, vector<1x128xf32>
    %23 = vector.broadcast %22 : vector<1x128xf32> to vector<4x128xf32>
    %24 = arith.addf %21, %23 : vector<4x128xf32>
    %c0_9 = arith.constant 0 : index
    %c0_10 = arith.constant 0 : index
    %25 = vector.load %arg4[%c0_9, %c0_10] : memref<4x128xf32, #tpu.memory_space<vmem>>, vector<4x128xf32>
    tpu.vector_store %arg4[%c0_9, %c0_10], %24 {strides = array<i32>} : memref<4x128xf32, #tpu.memory_space<vmem>>, vector<4x128xf32>,
    return
  }
  func.func @transform_0(%arg0: i32) -> (i32, i32) {
    %c0_i32 = arith.constant 0 : i32
    %c0_i32_0 = arith.constant 0 : i32
    return %arg0, %c0_i32 : i32, i32
  }
  func.func @transform_1(%arg0: i32) -> (i32, i32) {
    %c0_i32 = arith.constant 0 : i32
    %c0_i32_0 = arith.constant 0 : i32
    %c0_i32_1 = arith.constant 0 : i32
    return %c0_i32, %c0_i32_0 : i32, i32
  }
  func.func @transform_2(%arg0: i32) -> (i32, i32) {
    %c0_i32 = arith.constant 0 : i32
    %c0_i32_0 = arith.constant 0 : i32
    %c0_i32_1 = arith.constant 0 : i32
    return %c0_i32, %c0_i32_0 : i32, i32
  }
  func.func @transform_3(%arg0: i32) -> (i32, i32) {
    %c0_i32 = arith.constant 0 : i32
    %c0_i32_0 = arith.constant 0 : i32
    return %arg0, %c0_i32 : i32, i32
  }
}

</mosaic_0001>

<llo_original>
// kernel: tpu_custom_call.1
$region0: #{tpu_custom_call.1}
  #allocation0 [shape = 'u32[]', space=smem, size = 0x4, offset = 0x4, fixed_abs, tag = 'smem constant byte address 0x4 - core index']
  #allocation1 [shape = 'u32[144,128]{1,0:T(1,128)}', space=vmem, size = 0x12000, scoped, tag = 'internal scratch']
  %s0 = inlined_call_operand.hbm [shape: f32[4,128], index: 0, kind: input, shape index: {}]
  %s1 = inlined_call_operand.vmem [shape: f32[1,128], index: 1, kind: input, shape index: {}]
  %s2 = inlined_call_operand.vmem [shape: f32[1,128], index: 2, kind: input, shape index: {}]
  %s3 = inlined_call_operand.hbm [shape: f32[4,128], index: 3, kind: output, shape index: {}]
  %s4 = sld [smem:[#allocation0]]
  $region26: #{tpu_custom_call.1} parent=0
    _
  %s6 = ssub.s32 1, %s4
  %s7 = scalar_select 0, %s6, %s4
  $region1: #{tpu_custom_call.1} parent=0
    #allocation2 [shape = 'u8[2048]{0}', space=vmem, size = 0x800, scoped, tag = 'input window, operand 0, single buffered']
    #allocation3 [shape = 's32[1]{0}', space=sflag, size = 0x4, scoped, tag = 'scoped memory for tpu_custom_call.1']
    #allocation4 [shape = 's32[1]{0}', space=sflag, size = 0x4, scoped, tag = 'scoped memory for tpu_custom_call.1']
    #allocation5 [shape = 'u8[2048]{0}', space=vmem, size = 0x800, scoped, tag = 'output window, operand 0, single buffered']
    %8 = vsyncpa [#allocation3], 0
    %9 = vsyncpa [#allocation4], 0
    // Predicated region
    $region2: #{tpu_custom_call.1} parent=1 // pred_check
      _
    $region3: #{tpu_custom_call.1} parent=1 // pred_check_branch
      %11 = sbr.rel (0) target = $region5
    $region4: #{tpu_custom_call.1} parent=1 // pred_region
      %s13 = ssub.s32 64, 64
      %14 = vsyncadd [#allocation3], %s13
      %s16 = sshll.u32 [#allocation2], 4
      %s17 = int_to_ptr.vmem [resolvable:$true] %s16
      %19 = dma.hbm_to_vmem [thread:$0]  %s0, 64, %s17, [#allocation3]
    $region5: #{tpu_custom_call.1} parent=1 // pred_fallthru
      _
    // Predicated region
    $region6: #{tpu_custom_call.1} parent=1 // pred_check
      _
    $region7: #{tpu_custom_call.1} parent=1 // pred_check_branch
      %21 = sbr.rel (0) target = $region9
    $region8: #{tpu_custom_call.1} parent=1 // pred_region
      _
    $region9: #{tpu_custom_call.1} parent=1 // pred_fallthru
      _
    // Predicated region
    $region10: #{tpu_custom_call.1} parent=1 // pred_check
      _
    $region11: #{tpu_custom_call.1} parent=1 // pred_check_branch
      %23 = sbr.rel (0) target = $region13
    $region12: #{tpu_custom_call.1} parent=1 // pred_region
      _
    $region13: #{tpu_custom_call.1} parent=1 // pred_fallthru
      _
    // Predicated region
    $region14: #{tpu_custom_call.1} parent=1 // pred_check
      _
    $region15: #{tpu_custom_call.1} parent=1 // pred_check_branch
      %25 = sbr.rel (0) target = $region17
    $region16: #{tpu_custom_call.1} parent=1 // pred_region
      %26 = dma.done [#allocation3], 64
    $region17: #{tpu_custom_call.1} parent=1 // pred_fallthru
      _
    %v27 = vld [vmem:[#allocation2] sm:$0xf]
    %29 = vrot.lane.b32.xlu0 %v27, 96
    %v30 = vpop.permute.xlu0 %29
    %32 = vrot.lane.b32.xlu0 %v27, 64
    %v33 = vpop.permute.xlu0 %32
    %35 = vrot.lane.b32.xlu0 %v27, 32
    %v36 = vpop.permute.xlu0 %35
    %v38 = vcombine.low %v27, %v33
    %v40 = vunpack.c.l.s4 1983009808
    %v41 = vunpack.c.0.s8 %v40
    %v42 = vlaneseq
    %v43 = vshrl.u32 %v42, 7
    %v44 = vsub.s32 %v41, %v43
    %v45 = vrot.slane %v38, %v44
    %v46 = vcombine.low %v30, %v36
    %v48 = vunpack.c.l.s4 1983009808
    %v49 = vunpack.c.0.s8 %v48
    %v50 = vlaneseq
    %v51 = vshrl.u32 %v50, 7
    %v52 = vsub.s32 %v49, %v51
    %v53 = vrot.slane %v46, %v52
    %v54 = vcombine.low %v45, %v53
    %v55 = vcombine.high %v45, %v53
    %v57 = vunpack.c.l.s4 1934713408
    %v58 = vunpack.c.0.s8 %v57
    %v59 = vlaneseq
    %v60 = vshrl.u32 %v59, 7
    %v61 = vsub.s32 %v58, %v60
    %v62 = vrot.slane %v54, %v61
    %v64 = vunpack.c.l.s4 1934713408
    %v65 = vunpack.c.0.s8 %v64
    %v66 = vlaneseq
    %v67 = vshrl.u32 %v66, 7
    %v68 = vsub.s32 %v65, %v67
    %v69 = vrot.slane %v55, %v68
    %v70 = vcombine.high %v62, 0.0
    %v71 = vcombine.high %v69, 0.0
    %vm72 = vcmask 257024
    %v73 = vsel %vm72, %v62, 0.0
    %74 = vadd.xlane.f32.xlu0 %v73
    %v75 = vpop.xlane.xlu0 %74
    %v76 = vsel %vm72, %v70, 0.0
    %77 = vadd.xlane.f32.xlu0 %v76
    %v78 = vpop.xlane.xlu0 %77
    %v79 = vsel %vm72, %v69, 0.0
    %80 = vadd.xlane.f32.xlu0 %v79
    %v81 = vpop.xlane.xlu0 %80
    %v82 = vsel %vm72, %v71, 0.0
    %83 = vadd.xlane.f32.xlu0 %v82
    %v84 = vpop.xlane.xlu0 %83
    %v85 = vmul.f32 %v75, 0.03125
    %v86 = vmul.f32 %v78, 0.03125
    %v87 = vmul.f32 %v81, 0.03125
    %v88 = vmul.f32 %v84, 0.03125
    %v89 = vsub.f32 %v62, %v85
    %v90 = vsub.f32 %v70, %v86
    %v91 = vsub.f32 %v69, %v87
    %v92 = vsub.f32 %v71, %v88
    %v93 = vmul.f32 %v89, %v89
    %v94 = vmul.f32 %v90, %v90
    %v95 = vmul.f32 %v91, %v91
    %v96 = vmul.f32 %v92, %v92
    %v97 = vsel %vm72, %v93, 0.0
    %98 = vadd.xlane.f32.xlu0 %v97
    %v99 = vpop.xlane.xlu0 %98
    %v100 = vsel %vm72, %v94, 0.0
    %101 = vadd.xlane.f32.xlu0 %v100
    %v102 = vpop.xlane.xlu0 %101
    %v103 = vsel %vm72, %v95, 0.0
    %104 = vadd.xlane.f32.xlu0 %v103
    %v105 = vpop.xlane.xlu0 %104
    %v106 = vsel %vm72, %v96, 0.0
    %107 = vadd.xlane.f32.xlu0 %v106
    %v108 = vpop.xlane.xlu0 %107
    %v109 = vmul.f32 %v99, 0.03125
    %v110 = vmul.f32 %v102, 0.03125
    %v111 = vmul.f32 %v105, 0.03125
    %v112 = vmul.f32 %v108, 0.03125
    %v113 = vadd.f32 %v109, 1e-05
    %v114 = vadd.f32 %v110, 1e-05
    %v115 = vadd.f32 %v111, 1e-05
    %v116 = vadd.f32 %v112, 1e-05
    %v117 = vrsqrt.pop %v113
    %v118 = vrsqrt.pop %v114
    %v119 = vrsqrt.pop %v115
    %v120 = vrsqrt.pop %v116
    %v121 = vmul.f32 %v89, %v117
    %v122 = vmul.f32 %v90, %v118
    %v123 = vmul.f32 %v91, %v119
    %v124 = vmul.f32 %v92, %v120
    %v125 = vcombine.low %v121, %v123
    %v127 = vunpack.c.l.s4 1983009808
    %v128 = vunpack.c.0.s8 %v127
    %v129 = vlaneseq
    %v130 = vshrl.u32 %v129, 7
    %v131 = vsub.s32 %v128, %v130
    %v132 = vrot.slane %v125, %v131
    %v133 = vcombine.low %v122, %v124
    %v135 = vunpack.c.l.s4 1983009808
    %v136 = vunpack.c.0.s8 %v135
    %v137 = vlaneseq
    %v138 = vshrl.u32 %v137, 7
    %v139 = vsub.s32 %v136, %v138
    %v140 = vrot.slane %v133, %v139
    %v141 = vcombine.low %v132, %v140
    %v142 = vcombine.high %v132, %v140
    %v144 = vunpack.c.l.s4 1934713408
    %v145 = vunpack.c.0.s8 %v144
    %v146 = vlaneseq
    %v147 = vshrl.u32 %v146, 7
    %v148 = vsub.s32 %v145, %v147
    %v149 = vrot.slane %v141, %v148
    %v151 = vunpack.c.l.s4 1934713408
    %v152 = vunpack.c.0.s8 %v151
    %v153 = vlaneseq
    %v154 = vshrl.u32 %v153, 7
    %v155 = vsub.s32 %v152, %v154
    %v156 = vrot.slane %v142, %v155
    %v157 = vcombine.high %v149, 0.0
    %v158 = vcombine.high %v156, 0.0
    %160 = vrot.lane.b32.xlu0 %v157, 32
    %v161 = vpop.permute.xlu0 %160
    %164 = vrot.lane.b32.xlu0 %v156, 64
    %v165 = vpop.permute.xlu0 %164
    %168 = vrot.lane.b32.xlu0 %v158, 96
    %v169 = vpop.permute.xlu0 %168
    %vm171 = vcmask 261120
    %v172 = vsel %vm171, %v149, %v161
    %vm173 = vcmask 523264
    %v174 = vsel %vm173, %v172, %v165
    %vm175 = vcmask 785408
    %v176 = vsel %vm175, %v174, %v169
    %v177 = vld [vmem:[%s1] sm:$0x1]
    %v179 = vlaneseq
    %v180 = vshrl.u32 %v179, 7
    %v181 = vsub.s32 0, %v180
    %v182 = vrot.slane %v177, %v181
    %v184 = vmul.f32 %v176, %v182
    %v185 = vld [vmem:[%s2] sm:$0x1]
    %v187 = vlaneseq
    %v188 = vshrl.u32 %v187, 7
    %v189 = vsub.s32 0, %v188
    %v190 = vrot.slane %v185, %v189
    %v192 = vadd.f32 %v184, %v190
    %193 = vst [vmem:[#allocation5] sm:$0xf] %v192
    // Predicated region
    $region18: #{tpu_custom_call.1} parent=1 // pred_check
      _
    $region19: #{tpu_custom_call.1} parent=1 // pred_check_branch
      %195 = sbr.rel (0) target = $region21
    $region20: #{tpu_custom_call.1} parent=1 // pred_region
      %s197 = ssub.s32 64, 64
      %198 = vsyncadd [#allocation4], %s197
      %s200 = sshll.u32 [#allocation5], 4
      %s201 = int_to_ptr.vmem [resolvable:$true] %s200
      %203 = dma.vmem_to_hbm [thread:$0]  %s201, 64, %s3, [#allocation4]
    $region21: #{tpu_custom_call.1} parent=1 // pred_fallthru
      _
    // Predicated region
    $region22: #{tpu_custom_call.1} parent=1 // pred_check
      _
    $region23: #{tpu_custom_call.1} parent=1 // pred_check_branch
      %205 = sbr.rel (0) target = $region25
    $region24: #{tpu_custom_call.1} parent=1 // pred_region
      %206 = dma.done [#allocation4], 64
    $region25: #{tpu_custom_call.1} parent=1 // pred_fallthru
      _
    %207 = vsyncpa [#allocation3], 1
    %208 = vsyncpa [#allocation4], 1

</llo_original>
